<compile_context>
chip_gen: v7x
topology: tpu7x:2x2x1
jax: 0.10.0
libtpu: 0.0.40
codegen_flags: <defaults>
</compile_context>

<pallas_src>
import jax
import jax.numpy as jnp
from jax.experimental import pallas as pl
from jax.experimental.pallas import tpu as pltpu


# ----------------------------------------------------------------------------
# Kernels
# ----------------------------------------------------------------------------
def _sigmoid_f32(y):
    # 1 / (1 + exp(-y)); exp -> EUP slot, exact reciprocal keeps 1e-5 accuracy.
    return pl.reciprocal(1.0 + jnp.exp(-y))


def _head_kernel(x_ref, w_ref, b_ref, o_ref):
    # x_ref: (Cin, tm)  w_ref: (Cout, Cin)  b_ref: (Cout, 1)  o_ref: (Cout, tm)
    y = jnp.dot(w_ref[...], x_ref[...], preferred_element_type=jnp.float32)
    o_ref[...] = _sigmoid_f32(y + b_ref[...]).astype(o_ref.dtype)


def _two_head_kernel(x_ref, wl_ref, bl_ref, wa_ref, ba_ref, lsd_ref, aff_ref):
    # Fused: both heads read the same activation tile (one HBM read of x).
    x = x_ref[...]
    yl = jnp.dot(wl_ref[...], x, preferred_element_type=jnp.float32) + bl_ref[...]
    ya = jnp.dot(wa_ref[...], x, preferred_element_type=jnp.float32) + ba_ref[...]
    lsd_ref[...] = _sigmoid_f32(yl).astype(lsd_ref.dtype)
    aff_ref[...] = _sigmoid_f32(ya).astype(aff_ref.dtype)


# ----------------------------------------------------------------------------
# Wrappers
# ----------------------------------------------------------------------------
def _pick_tile(m, target=8192):
    # A block equal to the full dim is always legal; otherwise it must be a
    # multiple of 128 (Pallas masks the partial trailing tile).
    return m if m <= target else target


def conv1x1_sigmoid(x_ncdhw, w, b, *, tm_target=8192):
    """sigmoid(Conv3d(Cin, Cout, kernel_size=1)(x)), x in NCDHW.

    x: (N, Cin, D, H, W);  w: (Cout, Cin);  b: (Cout,)  ->  (N, Cout, D, H, W)
    """
    n, cin, d, h, wsp = x_ncdhw.shape
    cout = w.shape[0]
    m = d * h * wsp
    x3 = x_ncdhw.reshape(n, cin, m)            # free, contiguous reshape
    tm = _pick_tile(m, tm_target)

    cost = pl.CostEstimate(
        flops=2 * n * m * cin * cout,
        transcendentals=n * m * cout,
        bytes_accessed=n * m * (cin + cout) * x3.dtype.itemsize
        + (cout * cin + cout) * 4,
    )

    out = pl.pallas_call(
        _head_kernel,
        out_shape=jax.ShapeDtypeStruct((n, cout, m), x3.dtype),
        grid_spec=pltpu.PrefetchScalarGridSpec(
            num_scalar_prefetch=0,
            grid=(n, pl.cdiv(m, tm)),
            in_specs=[
                pl.BlockSpec((None, cin, tm), lambda bn, i: (bn, 0, i)),
                pl.BlockSpec((cout, cin), lambda bn, i: (0, 0)),
                pl.BlockSpec((cout, 1), lambda bn, i: (0, 0)),
            ],
            out_specs=pl.BlockSpec((None, cout, tm), lambda bn, i: (bn, 0, i)),
        ),
        compiler_params=pltpu.CompilerParams(
            dimension_semantics=("parallel", "parallel")),
        cost_estimate=cost,
    )(x3, w, b.reshape(cout, 1))

    return out.reshape(n, cout, d, h, wsp)


def conv1x1_sigmoid_two_heads(x_ncdhw, w_lsd, b_lsd, w_aff, b_aff,
                              *, tm_target=8192):
    """Fused lsd/aff heads sharing one activation tensor (read x once)."""
    n, cin, d, h, wsp = x_ncdhw.shape
    c_lsd, c_aff = w_lsd.shape[0], w_aff.shape[0]
    m = d * h * wsp
    x3 = x_ncdhw.reshape(n, cin, m)            # free, contiguous reshape
    tm = _pick_tile(m, tm_target)

    cost = pl.CostEstimate(
        flops=2 * n * m * cin * (c_lsd + c_aff),
        transcendentals=n * m * (c_lsd + c_aff),
        bytes_accessed=n * m * (cin + c_lsd + c_aff) * x3.dtype.itemsize
        + ((c_lsd + c_aff) * (cin + 1)) * 4,
    )

    lsd, aff = pl.pallas_call(
        _two_head_kernel,
        out_shape=(
            jax.ShapeDtypeStruct((n, c_lsd, m), x3.dtype),
            jax.ShapeDtypeStruct((n, c_aff, m), x3.dtype),
        ),
        grid_spec=pltpu.PrefetchScalarGridSpec(
            num_scalar_prefetch=0,
            grid=(n, pl.cdiv(m, tm)),
            in_specs=[
                pl.BlockSpec((None, cin, tm), lambda bn, i: (bn, 0, i)),
                pl.BlockSpec((c_lsd, cin), lambda bn, i: (0, 0)),
                pl.BlockSpec((c_lsd, 1), lambda bn, i: (0, 0)),
                pl.BlockSpec((c_aff, cin), lambda bn, i: (0, 0)),
                pl.BlockSpec((c_aff, 1), lambda bn, i: (0, 0)),
            ],
            out_specs=(
                pl.BlockSpec((None, c_lsd, tm), lambda bn, i: (bn, 0, i)),
                pl.BlockSpec((None, c_aff, tm), lambda bn, i: (bn, 0, i)),
            ),
        ),
        compiler_params=pltpu.CompilerParams(
            dimension_semantics=("parallel", "parallel")),
        cost_estimate=cost,
    )(x3, w_lsd, b_lsd.reshape(c_lsd, 1), w_aff, b_aff.reshape(c_aff, 1))

    return (lsd.reshape(n, c_lsd, d, h, wsp),
            aff.reshape(n, c_aff, d, h, wsp))


# ----------------------------------------------------------------------------
# MTLSDModel
# ----------------------------------------------------------------------------
class MTLSDModelPallas:
    def __init__(self, unet, num_fmaps, key):
        self.unet = unet
        k1, k2, k3, k4 = jax.random.split(key, 4)
        bound = 1.0 / jnp.sqrt(num_fmaps)  # PyTorch Conv3d default init range
        # Weights stored (Cout, Cin) -- PyTorch Conv3d's native layout with the
        # 1x1x1 kernel dims squeezed, and exactly what the kernel consumes.
        self.aff_w = jax.random.uniform(k1, (3, num_fmaps), jnp.float32,
                                        -bound, bound)
        self.aff_b = jax.random.uniform(k2, (3,), jnp.float32, -bound, bound)
        self.lsd_w = jax.random.uniform(k3, (10, num_fmaps), jnp.float32,
                                        -bound, bound)
        self.lsd_b = jax.random.uniform(k4, (10,), jnp.float32, -bound, bound)

    def __call__(self, inp):
        x = self.unet(inp)                      # -> (x[0], x[1])
        if x[0] is x[1]:
            # Both heads share the feature map: one fused kernel, one HBM read.
            return conv1x1_sigmoid_two_heads(
                x[0], self.lsd_w, self.lsd_b, self.aff_w, self.aff_b)
        lsds = conv1x1_sigmoid(x[0], self.lsd_w, self.lsd_b)
        affs = conv1x1_sigmoid(x[1], self.aff_w, self.aff_b)
        return lsds, affs


# TODO(synk): the real `unet` is an externally constructed funlib UNet passed
# to __init__; here we use a deterministic two-output identity stand-in that
# mimics a UNet with num_heads=2 (two feature maps, num_fmaps channels).
def _stub_unet(x):
    return (x, x)


# ----------------------------------------------------------------------------
# main
# ----------------------------------------------------------------------------
if __name__ == "__main__":
    key = jax.random.PRNGKey(0)
    k_in, k_par = jax.random.split(key)

    # Small shapes consistent with the module: batch=2, num_fmaps=16,
    # 3D spatial volume 4 x 8 x 8.
    N, num_fmaps, D, H, W = 2, 16, 4, 8, 8
    inp = jax.random.normal(k_in, (N, num_fmaps, D, H, W), jnp.float32)

    model = MTLSDModelPallas(_stub_unet, num_fmaps, k_par)

    # Fused path (stub UNet feeds both heads from the same tensor).
    lsds, affs = model(inp)
    lsds, affs = jax.block_until_ready((lsds, affs))

    # Also exercise the single-head path (used when x[0] is not x[1]).
    lsds_single = jax.block_until_ready(
        conv1x1_sigmoid(inp, model.lsd_w, model.lsd_b))

    # Reference check in plain JAX (same math, no Pallas).
    def ref_head(x, w, b):
        y = jnp.einsum("ncdhw,fc->nfdhw", x, w) + b[None, :, None, None, None]
        return jax.nn.sigmoid(y)

    x0, x1 = _stub_unet(inp)
    lsds_ref = ref_head(x0, model.lsd_w, model.lsd_b)
    affs_ref = ref_head(x1, model.aff_w, model.aff_b)

    assert lsds.shape == (N, 10, D, H, W), lsds.shape
    assert affs.shape == (N, 3, D, H, W), affs.shape
    assert jnp.allclose(lsds, lsds_ref, atol=1e-5, rtol=1e-5)
    assert jnp.allclose(affs, affs_ref, atol=1e-5, rtol=1e-5)
    assert jnp.allclose(lsds_single, lsds_ref, atol=1e-5, rtol=1e-5)

    print("KERNEL_OK")
</pallas_src>

<mosaic_0001>
module attributes {stable_mosaic.version = 11 : i64} {
  func.func @_two_head_kernel(%arg0: i32, %arg1: i32, %arg2: memref<1x16x256xf32, #tpu.memory_space<vmem>>, %arg3: memref<10x16xf32, #tpu.memory_space<vmem>>, %arg4: memref<10x1xf32, #tpu.memory_space<vmem>>, %arg5: memref<3x16xf32, #tpu.memory_space<vmem>>, %arg6: memref<3x1xf32, #tpu.memory_space<vmem>>, %arg7: memref<1x10x256xf32, #tpu.memory_space<vmem>>, %arg8: memref<1x3x256xf32, #tpu.memory_space<vmem>>) attributes {dimension_semantics = [#tpu.dimension_semantics<parallel>, #tpu.dimension_semantics<parallel>], iteration_bounds = array<i64: 2, 1>, scalar_prefetch = 0 : i64, scratch_operands = 0 : i64, tpu.core_type = #tpu.core_type<tc>, window_params = [{transform_indices = @transform_0, window_bounds = array<i64: 1, 16, 256>}, {pipeline_mode = #tpu.pipeline_mode<synchronous>, transform_indices = @transform_1, window_bounds = array<i64: 10, 16>}, {pipeline_mode = #tpu.pipeline_mode<synchronous>, transform_indices = @transform_2, window_bounds = array<i64: 10, 1>}, {pipeline_mode = #tpu.pipeline_mode<synchronous>, transform_indices = @transform_3, window_bounds = array<i64: 3, 16>}, {pipeline_mode = #tpu.pipeline_mode<synchronous>, transform_indices = @transform_4, window_bounds = array<i64: 3, 1>}, {transform_indices = @transform_5, window_bounds = array<i64: 1, 10, 256>}, {transform_indices = @transform_6, window_bounds = array<i64: 1, 3, 256>}]} {
    %c0 = arith.constant 0 : index
    %c0_0 = arith.constant 0 : index
    %c0_1 = arith.constant 0 : index
    %0 = vector.load %arg2[%c0, %c0_0, %c0_1] : memref<1x16x256xf32, #tpu.memory_space<vmem>>, vector<1x16x256xf32>
    %1 = vector.shape_cast %0 : vector<1x16x256xf32> to vector<16x256xf32>
    %c0_2 = arith.constant 0 : index
    %c0_3 = arith.constant 0 : index
    %2 = vector.load %arg3[%c0_2, %c0_3] : memref<10x16xf32, #tpu.memory_space<vmem>>, vector<10x16xf32>
    %cst = arith.constant dense<0.000000e+00> : vector<10x256xf32>
    %3 = tpu.matmul %2, %1, %cst {dimension_numbers = #tpu.dot_dimension_numbers<[1], [0], [0], [1], [0, 0, 1, 1], [], []>} : vector<10x16xf32>, vector<16x256xf32>, vector<10x256xf32> -> vector<10x256xf32>
    %c0_4 = arith.constant 0 : index
    %c0_5 = arith.constant 0 : index
    %4 = vector.load %arg4[%c0_4, %c0_5] : memref<10x1xf32, #tpu.memory_space<vmem>>, vector<10x1xf32>
    %5 = vector.broadcast %4 : vector<10x1xf32> to vector<10x256xf32>
    %6 = arith.addf %3, %5 : vector<10x256xf32>
    %c0_6 = arith.constant 0 : index
    %c0_7 = arith.constant 0 : index
    %7 = vector.load %arg5[%c0_6, %c0_7] : memref<3x16xf32, #tpu.memory_space<vmem>>, vector<3x16xf32>
    %cst_8 = arith.constant dense<0.000000e+00> : vector<3x256xf32>
    %8 = tpu.matmul %7, %1, %cst_8 {dimension_numbers = #tpu.dot_dimension_numbers<[1], [0], [0], [1], [0, 0, 1, 1], [], []>} : vector<3x16xf32>, vector<16x256xf32>, vector<3x256xf32> -> vector<3x256xf32>
    %c0_9 = arith.constant 0 : index
    %c0_10 = arith.constant 0 : index
    %9 = vector.load %arg6[%c0_9, %c0_10] : memref<3x1xf32, #tpu.memory_space<vmem>>, vector<3x1xf32>
    %10 = vector.broadcast %9 : vector<3x1xf32> to vector<3x256xf32>
    %11 = arith.addf %8, %10 : vector<3x256xf32>
    %cst_11 = arith.constant 0.000000e+00 : f32
    %12 = vector.broadcast %cst_11 : f32 to vector<10x256xf32>
    %13 = arith.subf %12, %6 : vector<10x256xf32>
    %14 = math.exp %13 : vector<10x256xf32>
    %cst_12 = arith.constant 1.000000e+00 : f32
    %15 = vector.broadcast %cst_12 : f32 to vector<10x256xf32>
    %16 = arith.addf %15, %14 : vector<10x256xf32>
    %17 = tpu.reciprocal %16 : vector<10x256xf32> -> vector<10x256xf32>
    %c0_13 = arith.constant 0 : index
    %c0_14 = arith.constant 0 : index
    %c0_15 = arith.constant 0 : index
    %18 = vector.load %arg7[%c0_13, %c0_14, %c0_15] : memref<1x10x256xf32, #tpu.memory_space<vmem>>, vector<1x10x256xf32>
    %19 = vector.shape_cast %18 : vector<1x10x256xf32> to vector<10x256xf32>
    %20 = vector.shape_cast %17 : vector<10x256xf32> to vector<1x10x256xf32>
    tpu.vector_store %arg7[%c0_13, %c0_14, %c0_15], %20 {strides = array<i32>} : memref<1x10x256xf32, #tpu.memory_space<vmem>>, vector<1x10x256xf32>,
    %cst_16 = arith.constant 0.000000e+00 : f32
    %21 = vector.broadcast %cst_16 : f32 to vector<3x256xf32>
    %22 = arith.subf %21, %11 : vector<3x256xf32>
    %23 = math.exp %22 : vector<3x256xf32>
    %cst_17 = arith.constant 1.000000e+00 : f32
    %24 = vector.broadcast %cst_17 : f32 to vector<3x256xf32>
    %25 = arith.addf %24, %23 : vector<3x256xf32>
    %26 = tpu.reciprocal %25 : vector<3x256xf32> -> vector<3x256xf32>
    %c0_18 = arith.constant 0 : index
    %c0_19 = arith.constant 0 : index
    %c0_20 = arith.constant 0 : index
    %27 = vector.load %arg8[%c0_18, %c0_19, %c0_20] : memref<1x3x256xf32, #tpu.memory_space<vmem>>, vector<1x3x256xf32>
    %28 = vector.shape_cast %27 : vector<1x3x256xf32> to vector<3x256xf32>
    %29 = vector.shape_cast %26 : vector<3x256xf32> to vector<1x3x256xf32>
    tpu.vector_store %arg8[%c0_18, %c0_19, %c0_20], %29 {strides = array<i32>} : memref<1x3x256xf32, #tpu.memory_space<vmem>>, vector<1x3x256xf32>,
    return
  }
  func.func @transform_0(%arg0: i32, %arg1: i32) -> (i32, i32, i32) {
    %c0_i32 = arith.constant 0 : i32
    %c0_i32_0 = arith.constant 0 : i32
    return %arg0, %c0_i32, %arg1 : i32, i32, i32
  }
  func.func @transform_1(%arg0: i32, %arg1: i32) -> (i32, i32) {
    %c0_i32 = arith.constant 0 : i32
    %c0_i32_0 = arith.constant 0 : i32
    %c0_i32_1 = arith.constant 0 : i32
    return %c0_i32, %c0_i32_0 : i32, i32
  }
  func.func @transform_2(%arg0: i32, %arg1: i32) -> (i32, i32) {
    %c0_i32 = arith.constant 0 : i32
    %c0_i32_0 = arith.constant 0 : i32
    %c0_i32_1 = arith.constant 0 : i32
    return %c0_i32, %c0_i32_0 : i32, i32
  }
  func.func @transform_3(%arg0: i32, %arg1: i32) -> (i32, i32) {
    %c0_i32 = arith.constant 0 : i32
    %c0_i32_0 = arith.constant 0 : i32
    %c0_i32_1 = arith.constant 0 : i32
    return %c0_i32, %c0_i32_0 : i32, i32
  }
  func.func @transform_4(%arg0: i32, %arg1: i32) -> (i32, i32) {
    %c0_i32 = arith.constant 0 : i32
    %c0_i32_0 = arith.constant 0 : i32
    %c0_i32_1 = arith.constant 0 : i32
    return %c0_i32, %c0_i32_0 : i32, i32
  }
  func.func @transform_5(%arg0: i32, %arg1: i32) -> (i32, i32, i32) {
    %c0_i32 = arith.constant 0 : i32
    %c0_i32_0 = arith.constant 0 : i32
    return %arg0, %c0_i32, %arg1 : i32, i32, i32
  }
  func.func @transform_6(%arg0: i32, %arg1: i32) -> (i32, i32, i32) {
    %c0_i32 = arith.constant 0 : i32
    %c0_i32_0 = arith.constant 0 : i32
    return %arg0, %c0_i32, %arg1 : i32, i32, i32
  }
}

</mosaic_0001>

<llo_original>
// kernel: tpu_custom_call.1
$region0: #{tpu_custom_call.1}
  #allocation0 [shape = 'u32[]', space=smem, size = 0x4, offset = 0x4, fixed_abs, tag = 'smem constant byte address 0x4 - core index']
  #allocation1 [shape = 'u32[144,128]{1,0:T(1,128)}', space=vmem, size = 0x12000, scoped, tag = 'internal scratch']
  %s0 = inlined_call_operand.hbm [shape: f32[2,16,256], index: 0, kind: input, shape index: {}]
  %s1 = inlined_call_operand.vmem [shape: f32[10,16], index: 1, kind: input, shape index: {}]
  %s2 = inlined_call_operand.vmem [shape: f32[10,1], index: 2, kind: input, shape index: {}]
  %s3 = inlined_call_operand.vmem [shape: f32[3,16], index: 3, kind: input, shape index: {}]
  %s4 = inlined_call_operand.vmem [shape: f32[3,1], index: 4, kind: input, shape index: {}]
  %s5 = inlined_call_operand.vmem [shape: f32[2,10,256], index: 5, kind: output, shape index: {0}]
  %s6 = inlined_call_operand.vmem [shape: f32[2,3,256], index: 6, kind: output, shape index: {1}]
  %7 = xla_tuple %s5, %s6
  %s8 = sld [smem:[#allocation0]]
  $region65: #{tpu_custom_call.1} parent=0
    _
  %s10 = ssub.s32 1, %s8
  %s11 = scalar_select 0, %s10, %s8
  $region1: #{tpu_custom_call.1} parent=0
    #allocation2 [shape = 'u8[32768]{0}', space=vmem, size = 0x8000, scoped, tag = 'input window, operand 0']
    #allocation3 [shape = 's32[2]{0}', space=sflag, size = 0x8, scoped, tag = 'scoped memory for tpu_custom_call.1']
    %12 = vsyncpa [#allocation3], 0
    %s13 = scalar_lea.sflag [#allocation3], 1
    %14 = vsyncpa %s13, 0
    loop: start=0, step=1, limit=4
    $region2: #{tpu_custom_call.1} parent=1 // loop_pre_header
      _
    $region3: #{tpu_custom_call.1} parent=1 // loop_header
      %s16 = sphi 0, %s20
      %p17 = scmp.ge.s32.totalorder %s16, 4
      %s23 = sphi 0, %s35
      %s24 = sphi 0, %s31
      %s25 = sphi 0, %s23
      %s26 = sphi 0, %s24
      %s27 = sphi 0, %s25
      %s28 = sphi 0, %s26
      %s40 = sphi 0, %s42
      %s43 = sphi 0, %s40
      %s44 = sphi 0, %s43
      %s60 = sphi 0, %s44
      %s64 = sphi 0, %s64
      %s66 = sphi 0, %s64
      %s67 = sphi 0, %s66
      %s81 = sphi 0, %s67
      %s85 = sphi 0, %s85
      %s87 = sphi 0, %s85
      %s88 = sphi 0, %s87
      %s102 = sphi 0, %s88
      %s106 = sphi 0, %s106
      %s108 = sphi 0, %s106
      %s109 = sphi 0, %s108
      %s123 = sphi 0, %s109
      %s127 = sphi 0, %s127
      %s129 = sphi 0, %s127
      %s130 = sphi 0, %s129
      %s144 = sphi 0, %s130
      %s152 = sphi 0, %s154
      %s155 = sphi 0, %s152
      %s156 = sphi 0, %s155
      %s172 = sphi 0, %s156
      %s180 = sphi 0, %s182
      %s183 = sphi 0, %s180
      %s184 = sphi 0, %s183
      %s200 = sphi 0, %s184
    $region4: #{tpu_custom_call.1} parent=1 // loop_header_branch
      %19 = sbr.rel (%p17) target = $region8
    $region5: #{tpu_custom_call.1} parent=1 // loop_body
      %s21 = ssub.s32 %s16, 1
      %s22 = ssub.s32 %s16, 2
      %s29 = sadd.s32 1, %s24
      %p30 = scmp.ge.s32.totalorder %s29, 1
      %s31 = scalar_select %p30, 0, %s29
      %s32 = sadd.s32 1, %s23
      %s33 = scalar_select %p30, %s32, %s23
      %p34 = scmp.ge.s32.totalorder %s33, 2
      %s35 = scalar_select %p34, 0, %s33
      %s36 = ssub.s32 %s23, %s35
      %s37 = ssub.s32 %s24, %s31
      %s38 = sor.u32 %s36, %s37
      %p39 = scmp.eq.s32.totalorder %s38, 0
      %s41 = sadd.s32 %s40, 1
      %s42 = scalar_select %p39, %s40, %s41
      %p45 = pneg %p39
      %p46 = scmp.eq.s32.totalorder %s16, 1
      %p47 = por %p45, %p46
      %p48 = scmp.ne.s32.totalorder %s40, %s43
      %p49 = scmp.eq.s32.totalorder %s16, 0
      %p50 = por %p48, %p49
      %p51 = scmp.ne.s32.totalorder %s40, %s43
      %p52 = scmp.eq.s32.totalorder %s21, 1
      %p53 = por %p51, %p52
      %p54 = scmp.ne.s32.totalorder %s43, %s44
      %p55 = scmp.eq.s32.totalorder %s21, 0
      %p56 = por %p54, %p55
      %p57 = scmp.ne.s32.totalorder %s43, %s44
      %p58 = scmp.eq.s32.totalorder %s22, 1
      %p59 = por %p57, %p58
      %p61 = scmp.ne.s32.totalorder %s44, %s60
      %p62 = scmp.eq.s32.totalorder %s22, 0
      %p63 = por %p61, %p62
      %s65 = sadd.s32 %s64, 1
      %p68 = scmp.eq.s32.totalorder %s16, 1
      %p69 = scmp.ne.s32.totalorder %s64, %s66
      %p70 = scmp.eq.s32.totalorder %s16, 0
      %p71 = por %p69, %p70
      %p72 = scmp.ne.s32.totalorder %s64, %s66
      %p73 = scmp.eq.s32.totalorder %s21, 1
      %p74 = por %p72, %p73
      %p75 = scmp.ne.s32.totalorder %s66, %s67
      %p76 = scmp.eq.s32.totalorder %s21, 0
      %p77 = por %p75, %p76
      %p78 = scmp.ne.s32.totalorder %s66, %s67
      %p79 = scmp.eq.s32.totalorder %s22, 1
      %p80 = por %p78, %p79
      %p82 = scmp.ne.s32.totalorder %s67, %s81
      %p83 = scmp.eq.s32.totalorder %s22, 0
      %p84 = por %p82, %p83
      %s86 = sadd.s32 %s85, 1
      %p89 = scmp.eq.s32.totalorder %s16, 1
      %p90 = scmp.ne.s32.totalorder %s85, %s87
      %p91 = scmp.eq.s32.totalorder %s16, 0
      %p92 = por %p90, %p91
      %p93 = scmp.ne.s32.totalorder %s85, %s87
      %p94 = scmp.eq.s32.totalorder %s21, 1
      %p95 = por %p93, %p94
      %p96 = scmp.ne.s32.totalorder %s87, %s88
      %p97 = scmp.eq.s32.totalorder %s21, 0
      %p98 = por %p96, %p97
      %p99 = scmp.ne.s32.totalorder %s87, %s88
      %p100 = scmp.eq.s32.totalorder %s22, 1
      %p101 = por %p99, %p100
      %p103 = scmp.ne.s32.totalorder %s88, %s102
      %p104 = scmp.eq.s32.totalorder %s22, 0
      %p105 = por %p103, %p104
      %s107 = sadd.s32 %s106, 1
      %p110 = scmp.eq.s32.totalorder %s16, 1
      %p111 = scmp.ne.s32.totalorder %s106, %s108
      %p112 = scmp.eq.s32.totalorder %s16, 0
      %p113 = por %p111, %p112
      %p114 = scmp.ne.s32.totalorder %s106, %s108
      %p115 = scmp.eq.s32.totalorder %s21, 1
      %p116 = por %p114, %p115
      %p117 = scmp.ne.s32.totalorder %s108, %s109
      %p118 = scmp.eq.s32.totalorder %s21, 0
      %p119 = por %p117, %p118
      %p120 = scmp.ne.s32.totalorder %s108, %s109
      %p121 = scmp.eq.s32.totalorder %s22, 1
      %p122 = por %p120, %p121
      %p124 = scmp.ne.s32.totalorder %s109, %s123
      %p125 = scmp.eq.s32.totalorder %s22, 0
      %p126 = por %p124, %p125
      %s128 = sadd.s32 %s127, 1
      %p131 = scmp.eq.s32.totalorder %s16, 1
      %p132 = scmp.ne.s32.totalorder %s127, %s129
      %p133 = scmp.eq.s32.totalorder %s16, 0
      %p134 = por %p132, %p133
      %p135 = scmp.ne.s32.totalorder %s127, %s129
      %p136 = scmp.eq.s32.totalorder %s21, 1
      %p137 = por %p135, %p136
      %p138 = scmp.ne.s32.totalorder %s129, %s130
      %p139 = scmp.eq.s32.totalorder %s21, 0
      %p140 = por %p138, %p139
      %p141 = scmp.ne.s32.totalorder %s129, %s130
      %p142 = scmp.eq.s32.totalorder %s22, 1
      %p143 = por %p141, %p142
      %p145 = scmp.ne.s32.totalorder %s130, %s144
      %p146 = scmp.eq.s32.totalorder %s22, 0
      %p147 = por %p145, %p146
      %s148 = ssub.s32 %s23, %s35
      %s149 = ssub.s32 %s24, %s31
      %s150 = sor.u32 %s148, %s149
      %p151 = scmp.eq.s32.totalorder %s150, 0
      %s153 = sadd.s32 %s152, 1
      %s154 = scalar_select %p151, %s152, %s153
      %p157 = pneg %p151
      %p158 = scmp.eq.s32.totalorder %s16, 1
      %p159 = por %p157, %p158
      %p160 = scmp.ne.s32.totalorder %s152, %s155
      %p161 = scmp.eq.s32.totalorder %s16, 0
      %p162 = por %p160, %p161
      %p163 = scmp.ne.s32.totalorder %s152, %s155
      %p164 = scmp.eq.s32.totalorder %s21, 1
      %p165 = por %p163, %p164
      %p166 = scmp.ne.s32.totalorder %s155, %s156
      %p167 = scmp.eq.s32.totalorder %s21, 0
      %p168 = por %p166, %p167
      %p169 = scmp.ne.s32.totalorder %s155, %s156
      %p170 = scmp.eq.s32.totalorder %s22, 1
      %p171 = por %p169, %p170
      %p173 = scmp.ne.s32.totalorder %s156, %s172
      %p174 = scmp.eq.s32.totalorder %s22, 0
      %p175 = por %p173, %p174
      %s176 = ssub.s32 %s23, %s35
      %s177 = ssub.s32 %s24, %s31
      %s178 = sor.u32 %s176, %s177
      %p179 = scmp.eq.s32.totalorder %s178, 0
      %s181 = sadd.s32 %s180, 1
      %s182 = scalar_select %p179, %s180, %s181
      %p185 = pneg %p179
      %p186 = scmp.eq.s32.totalorder %s16, 1
      %p187 = por %p185, %p186
      %p188 = scmp.ne.s32.totalorder %s180, %s183
      %p189 = scmp.eq.s32.totalorder %s16, 0
      %p190 = por %p188, %p189
      %p191 = scmp.ne.s32.totalorder %s180, %s183
      %p192 = scmp.eq.s32.totalorder %s21, 1
      %p193 = por %p191, %p192
      %p194 = scmp.ne.s32.totalorder %s183, %s184
      %p195 = scmp.eq.s32.totalorder %s21, 0
      %p196 = por %p194, %p195
      %p197 = scmp.ne.s32.totalorder %s183, %s184
      %p198 = scmp.eq.s32.totalorder %s22, 1
      %p199 = por %p197, %p198
      %p201 = scmp.ne.s32.totalorder %s184, %s200
      %p202 = scmp.eq.s32.totalorder %s22, 0
      %p203 = por %p201, %p202
      %p204 = scmp.le.s32.totalorder 1, %s16
      %p205 = scmp.lt.s32.totalorder %s16, 3
      %p206 = pnand %p204, %p205
      %p207 = pneg %p206
      // Predicated region
      $region9: #{tpu_custom_call.1} parent=5 // pred_check
        _
      $region10: #{tpu_custom_call.1} parent=5 // pred_check_branch
        %209 = sbr.rel (%p206) target = $region12
      $region11: #{tpu_custom_call.1} parent=5 // pred_region
        %s210 = ssub.s32 %s16, 1
        // Predicated region
        $region13: #{tpu_custom_call.1} parent=11 // pred_check
          %p211 = pneg %p77
        $region14: #{tpu_custom_call.1} parent=11 // pred_check_branch
          %213 = sbr.rel (%p211) target = $region16
        $region15: #{tpu_custom_call.1} parent=11 // pred_region
          _
        $region16: #{tpu_custom_call.1} parent=11 // pred_fallthru
          _
        // Predicated region
        $region17: #{tpu_custom_call.1} parent=11 // pred_check
          %p214 = pneg %p98
        $region18: #{tpu_custom_call.1} parent=11 // pred_check_branch
          %216 = sbr.rel (%p214) target = $region20
        $region19: #{tpu_custom_call.1} parent=11 // pred_region
          _
        $region20: #{tpu_custom_call.1} parent=11 // pred_fallthru
          _
        // Predicated region
        $region21: #{tpu_custom_call.1} parent=11 // pred_check
          %p217 = pneg %p119
        $region22: #{tpu_custom_call.1} parent=11 // pred_check_branch
          %219 = sbr.rel (%p217) target = $region24
        $region23: #{tpu_custom_call.1} parent=11 // pred_region
          _
        $region24: #{tpu_custom_call.1} parent=11 // pred_fallthru
          _
        // Predicated region
        $region25: #{tpu_custom_call.1} parent=11 // pred_check
          %p220 = pneg %p140
        $region26: #{tpu_custom_call.1} parent=11 // pred_check_branch
          %222 = sbr.rel (%p220) target = $region28
        $region27: #{tpu_custom_call.1} parent=11 // pred_region
          _
        $region28: #{tpu_custom_call.1} parent=11 // pred_fallthru
          _
      $region12: #{tpu_custom_call.1} parent=5 // pred_fallthru
        _
      %p223 = scmp.lt.s32.totalorder %s16, 2
      // Predicated region
      $region29: #{tpu_custom_call.1} parent=5 // pred_check
        %p224 = pneg %p223
      $region30: #{tpu_custom_call.1} parent=5 // pred_check_branch
        %226 = sbr.rel (%p224) target = $region32
      $region31: #{tpu_custom_call.1} parent=5 // pred_region
        // Predicated region
        $region33: #{tpu_custom_call.1} parent=31 // pred_check
          %p227 = pneg %p50
        $region34: #{tpu_custom_call.1} parent=31 // pred_check_branch
          %229 = sbr.rel (%p227) target = $region36
        $region35: #{tpu_custom_call.1} parent=31 // pred_region
          %s230 = sand.u32 %s40, 1
          %s231 = scalar_lea.sflag [#allocation3], %s230
          %s232 = sand.u32 %s40, 1
          %s233 = smul.addr %s232, 32
          %s234 = scalar_lea.vmem [#allocation2], %s233
          %s235 = smul.u32 2, %s24
          %s237 = ssub.s32 512, 512
          %238 = vsyncadd %s231, %s237
          %s239 = smul.addr %s23, 4
          %s240 = sadd.s32 %s235, %s239
          %s241 = smul.addr %s240, 128
          %s242 = scalar_lea.hbm %s0, %s241
          %s243 = sshll.u32 %s234, 4
          %s244 = int_to_ptr.vmem [resolvable:$true] %s243
          %249 = dma.hbm_to_vmem [thread:$0]  %s242, 512, %s244, %s231, 256, 256, 16
        $region36: #{tpu_custom_call.1} parent=31 // pred_fallthru
          _
      $region32: #{tpu_custom_call.1} parent=5 // pred_fallthru
        _
      %p250 = scmp.le.s32.totalorder 1, %s16
      %p251 = scmp.lt.s32.totalorder %s16, 3
      %p252 = pnand %p250, %p251
      %p253 = pneg %p252
      // Predicated region
      $region37: #{tpu_custom_call.1} parent=5 // pred_check
        _
      $region38: #{tpu_custom_call.1} parent=5 // pred_check_branch
        %255 = sbr.rel (%p252) target = $region40
      $region39: #{tpu_custom_call.1} parent=5 // pred_region
        %s256 = ssub.s32 %s16, 1
        %s257 = sand.u32 %s43, 1
        %s258 = scalar_lea.sflag [#allocation3], %s257
        %s259 = sand.u32 %s43, 1
        %s260 = smul.addr %s259, 32
        %s261 = scalar_lea.vmem [#allocation2], %s260
        // Predicated region
        $region41: #{tpu_custom_call.1} parent=39 // pred_check
          %p262 = pneg %p56
        $region42: #{tpu_custom_call.1} parent=39 // pred_check_branch
          %264 = sbr.rel (%p262) target = $region44
        $region43: #{tpu_custom_call.1} parent=39 // pred_region
          %265 = dma.done %s258, 512
        $region44: #{tpu_custom_call.1} parent=39 // pred_fallthru
          _
        %s266 = sand.u32 %s43, 1
        %s267 = scalar_lea.sflag [#allocation3], %s266
        %s268 = sand.u32 %s43, 1
        %s269 = smul.addr %s268, 32
        %s270 = scalar_lea.vmem [#allocation2], %s269
        %p271 = pneg %p56
        %p272 = pneg %p53
        %p273 = pneg %p77
        %p274 = pneg %p74
        %p275 = pneg %p98
        %p276 = pneg %p95
        %p277 = pneg %p119
        %p278 = pneg %p116
        %p279 = pneg %p140
        %p280 = pneg %p137
        %p281 = pneg %p168
        %p282 = pneg %p165
        %s283 = smul.u32 2, %s26
        %p284 = scmp.lt.s32.totalorder %s25, 1
        %s285 = scalar_select %p284, %s25, 1
        %p286 = scmp.lt.s32.totalorder %s283, 1
        %s287 = scalar_select %p286, %s283, 1
        %s288 = smul.addr %s285, 4
        %s289 = sadd.s32 %s287, %s288
        %s290 = smul.addr %s289, 8
        %s291 = scalar_lea.vmem %s5, %s290
        %p292 = pneg %p196
        %p293 = pneg %p193
        %s294 = smul.u32 2, %s26
        %p295 = scmp.lt.s32.totalorder %s25, 1
        %s296 = scalar_select %p295, %s25, 1
        %p297 = scmp.lt.s32.totalorder %s294, 1
        %s298 = scalar_select %p297, %s294, 1
        %s299 = smul.addr %s296, 2
        %s300 = sadd.s32 %s298, %s299
        %s301 = smul.addr %s300, 4
        %s302 = scalar_lea.vmem %s6, %s301
        %s303 = smul.u32 2, %s26
        %s304 = smul.u32 2, %s26
        %p305 = scmp.lt.s32.totalorder %s25, 1
        %s306 = scalar_select %p305, %s25, 1
        %p307 = scmp.lt.s32.totalorder %s304, 1
        %s308 = scalar_select %p307, %s304, 1
        %s309 = smul.addr %s306, 4
        %s310 = sadd.s32 %s308, %s309
        %s311 = smul.addr %s310, 8
        %s312 = scalar_lea.vmem %s5, %s311
        %s313 = smul.u32 2, %s26
        %s314 = smul.u32 2, %s26
        %p315 = scmp.lt.s32.totalorder %s25, 1
        %s316 = scalar_select %p315, %s25, 1
        %p317 = scmp.lt.s32.totalorder %s314, 1
        %s318 = scalar_select %p317, %s314, 1
        %s319 = smul.addr %s316, 2
        %s320 = sadd.s32 %s318, %s319
        %s321 = smul.addr %s320, 4
        %s322 = scalar_lea.vmem %s6, %s321
        %s323 = smul.u32 2, %s26
        %v324 = vld [vmem:[%s261] sm:$0xff]
        %v325 = vld [vmem:[%s261 + $0x8] sm:$0xff]
        %v326 = vld [vmem:[%s261 + $0x10] sm:$0xff]
        %v327 = vld [vmem:[%s261 + $0x18] sm:$0xff]
        %v328 = vld [vmem:[%s1] sm:$0xff]
        %v329 = vld [vmem:[%s1 + $0x8] sm:$0x3]
        %v330 = vld [vmem:[%s2] sm:$0xff]
        %v331 = vld [vmem:[%s2 + $0x8] sm:$0x3]
        %333 = vset.pattern.permute.xlu0 0
        %334 = vperm.xlu0 %333, %v330
        %v335 = vpop.permute.xlu0 %334
        %338 = vset.pattern.permute.xlu0 0
        %339 = vperm.xlu0 %338, %v331
        %v340 = vpop.permute.xlu0 %339
        %vm342 = vcmask 130048
        %v344 = vsel %vm342, %v328, 0
        %v347 = vsel %vm342, %v329, 0
        %349 = vmatprep.subr.mxu0 %v325
        %350 = vmatpush1.msra.mxu0 %v324
        %351 = vmatprep.subr.mxu0 %v327
        %352 = vmatpush1.msra.mxu0 %v326
        %353 = vmatprep.subr.mxu0 0.0
        %354 = vmatpush1.msra.mxu0 0.0
        %355 = vmatprep.subr.mxu0 0.0
        %356 = vmatpush1.msra.mxu0 0.0
        %357 = vmatprep.subr.mxu0 0.0
        %358 = vmatpush1.msra.mxu0 0.0
        %359 = vmatprep.subr.mxu0 0.0
        %360 = vmatpush1.msra.mxu0 0.0
        %361 = vmatprep.subr.mxu0 0.0
        %362 = vmatpush1.msra.mxu0 0.0
        %363 = vmatprep.subr.mxu0 0.0
        %364 = vmatpush1.msra.mxu0 0.0
        %365 = vmatprep.subr.mxu0 0.0
        %366 = vmatpush1.msra.mxu0 0.0
        %367 = vmatprep.subr.mxu0 0.0
        %368 = vmatpush1.msra.mxu0 0.0
        %369 = vmatprep.subr.mxu0 0.0
        %370 = vmatpush1.msra.mxu0 0.0
        %371 = vmatprep.subr.mxu0 0.0
        %372 = vmatpush1.msra.mxu0 0.0
        %373 = vmatprep.subr.mxu0 0.0
        %374 = vmatpush1.msra.mxu0 0.0
        %375 = vmatprep.subr.mxu0 0.0
        %376 = vmatpush1.msra.mxu0 0.0
        %377 = vmatprep.subr.mxu0 0.0
        %378 = vmatpush1.msra.mxu0 0.0
        %379 = vmatprep.subr.mxu0 0.0
        %380 = vmatpush1.msra.mxu0 0.0
        %381 = vmatprep.subr.mxu0 0.0
        %382 = vmatpush1.msra.mxu0 0.0
        %383 = vmatprep.subr.mxu0 0.0
        %384 = vmatpush1.msra.mxu0 0.0
        %385 = vmatprep.subr.mxu0 0.0
        %386 = vmatpush1.msra.mxu0 0.0
        %387 = vmatprep.subr.mxu0 0.0
        %388 = vmatpush1.msra.mxu0 0.0
        %389 = vmatprep.subr.mxu0 0.0
        %390 = vmatpush1.msra.mxu0 0.0
        %391 = vmatprep.subr.mxu0 0.0
        %392 = vmatpush1.msra.mxu0 0.0
        %393 = vmatprep.subr.mxu0 0.0
        %394 = vmatpush1.msra.mxu0 0.0
        %395 = vmatprep.subr.mxu0 0.0
        %396 = vmatpush1.msra.mxu0 0.0
        %397 = vmatprep.subr.mxu0 0.0
        %398 = vmatpush1.msra.mxu0 0.0
        %399 = vmatprep.subr.mxu0 0.0
        %400 = vmatpush1.msra.mxu0 0.0
        %401 = vmatprep.subr.mxu0 0.0
        %402 = vmatpush1.msra.mxu0 0.0
        %403 = vmatprep.subr.mxu0 0.0
        %404 = vmatpush1.msra.mxu0 0.0
        %405 = vmatprep.subr.mxu0 0.0
        %406 = vmatpush1.msra.mxu0 0.0
        %407 = vmatprep.subr.mxu0 0.0
        %408 = vmatpush1.msra.mxu0 0.0
        %409 = vmatprep.subr.mxu0 0.0
        %410 = vmatpush1.msra.mxu0 0.0
        %411 = vmatprep.subr.mxu0 0.0
        %412 = vmatpush1.msra.mxu0 0.0
        %413 = vmatprep.mubr.f32.mxu0 0.0
        %414 = vmatmul.mubr.f32.gmra.mrb[0].mxu0 %v344
        %v415 = vpop.f32.mrb[0].mxu0
        %v416 = vadd.f32 %v335, %v415
        %v417 = vpop.f32.mrb[0].mxu0
        %v418 = vadd.f32 %v335, %v417
        %419 = vmatprep.mubr.f32.mxu0 0.0
        %420 = vmatmul.mubr.f32.gmra.mrb[0].mxu0 %v347
        %v421 = vpop.f32.mrb[0].mxu0
        %v422 = vadd.f32 %v340, %v421
        %v423 = vpop.f32.mrb[0].mxu0
        %v424 = vadd.f32 %v340, %v423
        %425 = vdwg.mxu0
        %v426 = vld [vmem:[%s3] sm:$0x7]
        %v427 = vld [vmem:[%s4] sm:$0x7]
        %429 = vset.pattern.permute.xlu0 0
        %430 = vperm.xlu0 %429, %v427
        %v431 = vpop.permute.xlu0 %430
        %v434 = vsel %vm342, %v426, 0
        %436 = vmatprep.subr.mxu0 %v325
        %437 = vmatpush1.msra.mxu0 %v324
        %438 = vmatprep.subr.mxu0 %v327
        %439 = vmatpush1.msra.mxu0 %v326
        %440 = vmatprep.subr.mxu0 0.0
        %441 = vmatpush1.msra.mxu0 0.0
        %442 = vmatprep.subr.mxu0 0.0
        %443 = vmatpush1.msra.mxu0 0.0
        %444 = vmatprep.subr.mxu0 0.0
        %445 = vmatpush1.msra.mxu0 0.0
        %446 = vmatprep.subr.mxu0 0.0
        %447 = vmatpush1.msra.mxu0 0.0
        %448 = vmatprep.subr.mxu0 0.0
        %449 = vmatpush1.msra.mxu0 0.0
        %450 = vmatprep.subr.mxu0 0.0
        %451 = vmatpush1.msra.mxu0 0.0
        %452 = vmatprep.subr.mxu0 0.0
        %453 = vmatpush1.msra.mxu0 0.0
        %454 = vmatprep.subr.mxu0 0.0
        %455 = vmatpush1.msra.mxu0 0.0
        %456 = vmatprep.subr.mxu0 0.0
        %457 = vmatpush1.msra.mxu0 0.0
        %458 = vmatprep.subr.mxu0 0.0
        %459 = vmatpush1.msra.mxu0 0.0
        %460 = vmatprep.subr.mxu0 0.0
        %461 = vmatpush1.msra.mxu0 0.0
        %462 = vmatprep.subr.mxu0 0.0
        %463 = vmatpush1.msra.mxu0 0.0
        %464 = vmatprep.subr.mxu0 0.0
        %465 = vmatpush1.msra.mxu0 0.0
        %466 = vmatprep.subr.mxu0 0.0
        %467 = vmatpush1.msra.mxu0 0.0
        %468 = vmatprep.subr.mxu0 0.0
        %469 = vmatpush1.msra.mxu0 0.0
        %470 = vmatprep.subr.mxu0 0.0
        %471 = vmatpush1.msra.mxu0 0.0
        %472 = vmatprep.subr.mxu0 0.0
        %473 = vmatpush1.msra.mxu0 0.0
        %474 = vmatprep.subr.mxu0 0.0
        %475 = vmatpush1.msra.mxu0 0.0
        %476 = vmatprep.subr.mxu0 0.0
        %477 = vmatpush1.msra.mxu0 0.0
        %478 = vmatprep.subr.mxu0 0.0
        %479 = vmatpush1.msra.mxu0 0.0
        %480 = vmatprep.subr.mxu0 0.0
        %481 = vmatpush1.msra.mxu0 0.0
        %482 = vmatprep.subr.mxu0 0.0
        %483 = vmatpush1.msra.mxu0 0.0
        %484 = vmatprep.subr.mxu0 0.0
        %485 = vmatpush1.msra.mxu0 0.0
        %486 = vmatprep.subr.mxu0 0.0
        %487 = vmatpush1.msra.mxu0 0.0
        %488 = vmatprep.subr.mxu0 0.0
        %489 = vmatpush1.msra.mxu0 0.0
        %490 = vmatprep.subr.mxu0 0.0
        %491 = vmatpush1.msra.mxu0 0.0
        %492 = vmatprep.subr.mxu0 0.0
        %493 = vmatpush1.msra.mxu0 0.0
        %494 = vmatprep.subr.mxu0 0.0
        %495 = vmatpush1.msra.mxu0 0.0
        %496 = vmatprep.subr.mxu0 0.0
        %497 = vmatpush1.msra.mxu0 0.0
        %498 = vmatprep.subr.mxu0 0.0
        %499 = vmatpush1.msra.mxu0 0.0
        %500 = vmatprep.mubr.f32.mxu0 0.0
        %501 = vmatmul.mubr.f32.gmra.mrb[0].mxu0 %v434
        %v502 = vpop.f32.mrb[0].mxu0
        %v503 = vadd.f32 %v431, %v502
        %v504 = vpop.f32.mrb[0].mxu0
        %v505 = vadd.f32 %v431, %v504
        %506 = vdwg.mxu0
        %v507 = vsub.f32 0.0, %v416
        %v508 = vsub.f32 0.0, %v418
        %v509 = vsub.f32 0.0, %v422
        %v510 = vsub.f32 0.0, %v424
        %v511 = vmul.f32 %v507, 1.442695
        %v512 = vpow.pop %v511
        %v513 = vmul.f32 %v508, 1.442695
        %v514 = vpow.pop %v513
        %v515 = vmul.f32 %v509, 1.442695
        %v516 = vpow.pop %v515
        %v517 = vmul.f32 %v510, 1.442695
        %v518 = vpow.pop %v517
        %v519 = vadd.f32 %v512, 1.0
        %v520 = vadd.f32 %v514, 1.0
        %v521 = vadd.f32 %v516, 1.0
        %v522 = vadd.f32 %v518, 1.0
        %v523 = vrcp.pop %v519
        %v524 = vrcp.pop %v520
        %v525 = vrcp.pop %v521
        %v526 = vrcp.pop %v522
        %527 = vst [vmem:[%s312] sm:$0xff] %v523
        %528 = vst [vmem:[%s312 + $0x8] sm:$0xff] %v524
        %529 = vst [vmem:[%s312 + $0x10] sm:$0x3] %v525
        %530 = vst [vmem:[%s312 + $0x18] sm:$0x3] %v526
        %v531 = vsub.f32 0.0, %v503
        %v532 = vsub.f32 0.0, %v505
        %v533 = vmul.f32 %v531, 1.442695
        %v534 = vpow.pop %v533
        %v535 = vmul.f32 %v532, 1.442695
        %v536 = vpow.pop %v535
        %v537 = vadd.f32 %v534, 1.0
        %v538 = vadd.f32 %v536, 1.0
        %v539 = vrcp.pop %v537
        %v540 = vrcp.pop %v538
        %v543 = vcombine.low %v539, %v540
        %545 = vst [vmem:[%s322] sm:$0x77] %v543
        %s546 = smul.u32 2, %s26
        %p547 = scmp.lt.s32.totalorder %s25, 1
        %s548 = scalar_select %p547, %s25, 1
        %p549 = scmp.lt.s32.totalorder %s546, 1
        %s550 = scalar_select %p549, %s546, 1
        %s551 = smul.addr %s548, 4
        %s552 = sadd.s32 %s550, %s551
        %s553 = smul.addr %s552, 8
        %s554 = scalar_lea.vmem %s5, %s553
        %s555 = smul.u32 2, %s26
        %p556 = scmp.lt.s32.totalorder %s25, 1
        %s557 = scalar_select %p556, %s25, 1
        %p558 = scmp.lt.s32.totalorder %s555, 1
        %s559 = scalar_select %p558, %s555, 1
        %s560 = smul.addr %s557, 2
        %s561 = sadd.s32 %s559, %s560
        %s562 = smul.addr %s561, 4
        %s563 = scalar_lea.vmem %s6, %s562
        // Predicated region
        $region45: #{tpu_custom_call.1} parent=39 // pred_check
          %p564 = pneg %p165
        $region46: #{tpu_custom_call.1} parent=39 // pred_check_branch
          %566 = sbr.rel (%p564) target = $region48
        $region47: #{tpu_custom_call.1} parent=39 // pred_region
          %s567 = smul.u32 2, %s26
        $region48: #{tpu_custom_call.1} parent=39 // pred_fallthru
          _
        // Predicated region
        $region49: #{tpu_custom_call.1} parent=39 // pred_check
          %p568 = pneg %p193
        $region50: #{tpu_custom_call.1} parent=39 // pred_check_branch
          %570 = sbr.rel (%p568) target = $region52
        $region51: #{tpu_custom_call.1} parent=39 // pred_region
          %s571 = smul.u32 2, %s26
        $region52: #{tpu_custom_call.1} parent=39 // pred_fallthru
          _
      $region40: #{tpu_custom_call.1} parent=5 // pred_fallthru
        _
      %p572 = scmp.le.s32.totalorder 2, %s16
      // Predicated region
      $region53: #{tpu_custom_call.1} parent=5 // pred_check
        %p573 = pneg %p572
      $region54: #{tpu_custom_call.1} parent=5 // pred_check_branch
        %575 = sbr.rel (%p573) target = $region56
      $region55: #{tpu_custom_call.1} parent=5 // pred_region
        %s576 = ssub.s32 %s16, 2
        // Predicated region
        $region57: #{tpu_custom_call.1} parent=55 // pred_check
          %p577 = pneg %p171
        $region58: #{tpu_custom_call.1} parent=55 // pred_check_branch
          %579 = sbr.rel (%p577) target = $region60
        $region59: #{tpu_custom_call.1} parent=55 // pred_region
          %s580 = smul.u32 2, %s28
          %p581 = scmp.lt.s32.totalorder %s27, 1
          %s582 = scalar_select %p581, %s27, 1
          %p583 = scmp.lt.s32.totalorder %s580, 1
          %s584 = scalar_select %p583, %s580, 1
          %s585 = smul.addr %s582, 4
          %s586 = sadd.s32 %s584, %s585
          %s587 = smul.addr %s586, 8
          %s588 = scalar_lea.vmem %s5, %s587
        $region60: #{tpu_custom_call.1} parent=55 // pred_fallthru
          _
        // Predicated region
        $region61: #{tpu_custom_call.1} parent=55 // pred_check
          %p589 = pneg %p199
        $region62: #{tpu_custom_call.1} parent=55 // pred_check_branch
          %591 = sbr.rel (%p589) target = $region64
        $region63: #{tpu_custom_call.1} parent=55 // pred_region
          %s592 = smul.u32 2, %s28
          %p593 = scmp.lt.s32.totalorder %s27, 1
          %s594 = scalar_select %p593, %s27, 1
          %p595 = scmp.lt.s32.totalorder %s592, 1
          %s596 = scalar_select %p595, %s592, 1
          %s597 = smul.addr %s594, 2
          %s598 = sadd.s32 %s596, %s597
          %s599 = smul.addr %s598, 4
          %s600 = scalar_lea.vmem %s6, %s599
        $region64: #{tpu_custom_call.1} parent=55 // pred_fallthru
          _
      $region56: #{tpu_custom_call.1} parent=5 // pred_fallthru
        _
    $region6: #{tpu_custom_call.1} parent=1 // loop_footer
      %s20 = sadd.s32 1, %s16
    $region7: #{tpu_custom_call.1} parent=1 // loop_footer_branch
      %15 = sbr.rel target = $region3
    $region8: #{tpu_custom_call.1} parent=1 // loop_exit
      _
    %601 = vsyncpa [#allocation3], 1
    %s602 = scalar_lea.sflag [#allocation3], 1
    %603 = vsyncpa %s602, 1

</llo_original>
